<compile_context>
chip_gen: v5e
topology: v5e:2x2
jax: 0.10.0
libtpu: 0.0.40
codegen_flags: <defaults>
</compile_context>

<pallas_src>
import jax
import jax.numpy as jnp
from jax.experimental import pallas as pl
from jax.experimental.pallas import tpu as pltpu


# --------------------------------------------------------------------------- #
# Kernel
# --------------------------------------------------------------------------- #
def siamese_kernel(x_ref,
                   w1a_ref, b1a_ref, w2a_ref, b2a_ref,
                   w1b_ref, b1b_ref, w2b_ref, b2b_ref,
                   img_ref, txt_ref):
    x = x_ref[...]                                    # native dtype, no up-cast

    # ---- Branch 1 (images), end-to-end so only one f32 activation is live ----
    h = jnp.dot(x, w1a_ref[...], preferred_element_type=jnp.float32)
    h = jnp.maximum(h + b1a_ref[...].astype(jnp.float32), 0.0)    # f32 VPU epilogue
    y = jnp.dot(h.astype(w2a_ref.dtype), w2a_ref[...],
                preferred_element_type=jnp.float32)
    img_ref[...] = (y + b2a_ref[...].astype(jnp.float32)).astype(img_ref.dtype)

    # ---- Branch 2 (text); x is still resident in VMEM, re-read is free ----
    h = jnp.dot(x, w1b_ref[...], preferred_element_type=jnp.float32)
    h = jnp.maximum(h + b1b_ref[...].astype(jnp.float32), 0.0)
    y = jnp.dot(h.astype(w2b_ref.dtype), w2b_ref[...],
                preferred_element_type=jnp.float32)
    txt_ref[...] = (y + b2b_ref[...].astype(jnp.float32)).astype(txt_ref.dtype)


# --------------------------------------------------------------------------- #
# Tiling / VMEM sizing helpers
# --------------------------------------------------------------------------- #
def _round_up(n, m):
    return ((n + m - 1) // m) * m


def _vmem_budget_bytes():
    """Per-generation VMEM budget: ~3/4 of physical, capped at ~100 MiB
    (v5e/v6e: 128 MiB -> ~96-100 MiB; v7x: 64 MiB -> 48 MiB)."""
    try:
        cap = int(pltpu.get_tpu_info().vmem_capacity_bytes)
    except Exception:
        cap = 64 * 1024 * 1024          # conservative fallback: v7x per-TC VMEM
    return min((cap * 3) // 4, 100 * 1024 * 1024)


def _vmem_need_bytes(tile_b, input_dim, hid, out_pad, itemsize):
    # x tile (double-buffered) + two output tiles (double-buffered)
    io = 2 * tile_b * input_dim * itemsize + 2 * 2 * tile_b * out_pad * itemsize
    # per-branch weights/biases, single-buffered (pl.Buffered(1)), two branches
    w = 2 * (input_dim * hid + hid + hid * out_pad + out_pad) * itemsize
    # one branch's f32 activation + f32 pre-store result
    act = tile_b * hid * 4 + tile_b * out_pad * 4
    return io + w + act


def _pick_tile_b(B, input_dim, hid, out_pad, itemsize, budget):
    """Largest multiple-of-8 divisor of B that fits the VMEM budget; keep
    >= 2 grid steps whenever B >= 16 (v7x megacore sharding)."""
    if B < 16:
        return B
    cands = [t for t in (1024, 512, 256, 128, 64, 32, 16, 8)
             if t < B and B % t == 0]           # t < B  =>  >= 2 grid steps
    for t in cands:
        if _vmem_need_bytes(t, input_dim, hid, out_pad, itemsize) <= budget:
            return t
    return cands[-1] if cands else B            # no multiple-of-8 divisor: 1 step


# --------------------------------------------------------------------------- #
# Parameter preparation (done once, outside the kernel)
# --------------------------------------------------------------------------- #
def prepare_params(params, output_dim, dtype=None):
    """Per-branch params, layer-2 weights/biases lane-padded to a 128 multiple.
    Weights stored as [in, out] (already transposed vs. PyTorch: y = x @ W + b).
    Pass dtype=jnp.bfloat16 to halve weight HBM traffic / VMEM residency."""
    out_pad = _round_up(output_dim, 128)
    pad = out_pad - output_dim

    def cast(a):
        return a if dtype is None else a.astype(dtype)

    def pad_w(w):                           # [hid, out] -> [hid, out_pad]
        return jnp.pad(w, ((0, 0), (0, pad)))

    def pad_b(b):                           # [1, out] -> [1, out_pad]
        return jnp.pad(b, ((0, 0), (0, pad)))

    return dict(
        w1a=cast(params["w1a"]), b1a=cast(params["b1a"]),
        w2a=cast(pad_w(params["w2a"])), b2a=cast(pad_b(params["b2a"])),
        w1b=cast(params["w1b"]), b1b=cast(params["b1b"]),
        w2b=cast(pad_w(params["w2b"])), b2b=cast(pad_b(params["b2b"])),
        output_dim=output_dim, out_pad=out_pad)


# --------------------------------------------------------------------------- #
# Forward wrapper
# --------------------------------------------------------------------------- #
def non_shared_siamese_forward(x, fused, *, tile_b=None):
    """x: [B, input_dim]. fused: output of prepare_params. Returns (images, text)."""
    B, input_dim = x.shape
    hid = fused["w1a"].shape[1]
    out_pad = fused["out_pad"]
    output_dim = fused["output_dim"]
    itemsize = jnp.dtype(fused["w1a"].dtype).itemsize

    budget = _vmem_budget_bytes()
    if tile_b is None:
        tile_b = _pick_tile_b(B, input_dim, hid, out_pad, itemsize, budget)
    assert B % tile_b == 0, "batch must be divisible by tile_b"

    need = _vmem_need_bytes(tile_b, input_dim, hid, out_pad, itemsize)
    vmem_limit = int(min(budget, max(2 * need, 8 * 1024 * 1024)))

    # Constant-index weights: fetched once, single-buffered.
    def wspec(shape):
        return pl.BlockSpec(shape, lambda i: (0, 0), pipeline_mode=pl.Buffered(1))

    grid_spec = pltpu.PrefetchScalarGridSpec(
        num_scalar_prefetch=0,
        grid=(B // tile_b,),
        in_specs=[
            pl.BlockSpec((tile_b, input_dim), lambda i: (i, 0)),
            wspec((input_dim, hid)), wspec((1, hid)),
            wspec((hid, out_pad)), wspec((1, out_pad)),
            wspec((input_dim, hid)), wspec((1, hid)),
            wspec((hid, out_pad)), wspec((1, out_pad)),
        ],
        out_specs=(
            pl.BlockSpec((tile_b, out_pad), lambda i: (i, 0)),   # images (padded)
            pl.BlockSpec((tile_b, out_pad), lambda i: (i, 0)),   # text   (padded)
        ),
    )

    img_pad, txt_pad = pl.pallas_call(
        siamese_kernel,
        out_shape=(jax.ShapeDtypeStruct((B, out_pad), x.dtype),
                   jax.ShapeDtypeStruct((B, out_pad), x.dtype)),
        grid_spec=grid_spec,
        compiler_params=pltpu.CompilerParams(
            dimension_semantics=("parallel",),
            vmem_limit_bytes=vmem_limit,
        ),
    )(x,
      fused["w1a"], fused["b1a"], fused["w2a"], fused["b2a"],
      fused["w1b"], fused["b1b"], fused["w2b"], fused["b2b"])

    if out_pad == output_dim:            # no post-slice at all when out % 128 == 0
        return img_pad, txt_pad
    return img_pad[:, :output_dim], txt_pad[:, :output_dim]


# --------------------------------------------------------------------------- #
# Init + pure-JAX reference
# --------------------------------------------------------------------------- #
def init_params(key, input_dim, hidden_dim, output_dim, dtype=jnp.float32):
    """Deterministic init mimicking nn.Linear (uniform +-1/sqrt(fan_in)).
    Weights stored as [in, out] (already transposed vs. PyTorch)."""
    ks = jax.random.split(key, 8)

    def lin(kw, kb, fan_in, fan_out):
        bound = 1.0 / jnp.sqrt(fan_in)
        w = jax.random.uniform(kw, (fan_in, fan_out), dtype, -bound, bound)
        b = jax.random.uniform(kb, (1, fan_out), dtype, -bound, bound)
        return w, b

    w1a, b1a = lin(ks[0], ks[1], input_dim, hidden_dim)
    w2a, b2a = lin(ks[2], ks[3], hidden_dim, output_dim)
    w1b, b1b = lin(ks[4], ks[5], input_dim, hidden_dim)
    w2b, b2b = lin(ks[6], ks[7], hidden_dim, output_dim)
    return dict(w1a=w1a, b1a=b1a, w2a=w2a, b2a=b2a,
                w1b=w1b, b1b=b1b, w2b=w2b, b2b=b2b)


def reference_forward(x, p):
    h1 = jnp.maximum(x @ p["w1a"] + p["b1a"], 0.0)
    img = h1 @ p["w2a"] + p["b2a"]
    h2 = jnp.maximum(x @ p["w1b"] + p["b1b"], 0.0)
    txt = h2 @ p["w2b"] + p["b2b"]
    return img, txt


if __name__ == "__main__":
    B, input_dim, hidden_dim, output_dim = 8, 32, 64, 16

    key = jax.random.PRNGKey(0)
    kx, kp = jax.random.split(key)
    x = jax.random.normal(kx, (B, input_dim), jnp.float32)
    params = init_params(kp, input_dim, hidden_dim, output_dim)
    fused = prepare_params(params, output_dim)      # keep f32 for exact check

    images, text = non_shared_siamese_forward(x, fused)
    images = jax.block_until_ready(images)
    text = jax.block_until_ready(text)

    ref_img, ref_txt = reference_forward(x, params)
    assert images.shape == (B, output_dim) and text.shape == (B, output_dim)
    assert jnp.allclose(images, ref_img, atol=1e-5, rtol=1e-5)
    assert jnp.allclose(text, ref_txt, atol=1e-5, rtol=1e-5)

    print("KERNEL_OK")
</pallas_src>

<mosaic_0001>
module attributes {stable_mosaic.version = 11 : i64} {
  func.func @siamese_kernel(%arg0: i32, %arg1: memref<8x32xf32, #tpu.memory_space<vmem>>, %arg2: memref<32x64xf32, #tpu.memory_space<vmem>>, %arg3: memref<1x64xf32, #tpu.memory_space<vmem>>, %arg4: memref<64x128xf32, #tpu.memory_space<vmem>>, %arg5: memref<1x128xf32, #tpu.memory_space<vmem>>, %arg6: memref<32x64xf32, #tpu.memory_space<vmem>>, %arg7: memref<1x64xf32, #tpu.memory_space<vmem>>, %arg8: memref<64x128xf32, #tpu.memory_space<vmem>>, %arg9: memref<1x128xf32, #tpu.memory_space<vmem>>, %arg10: memref<8x128xf32, #tpu.memory_space<vmem>>, %arg11: memref<8x128xf32, #tpu.memory_space<vmem>>) attributes {dimension_semantics = [#tpu.dimension_semantics<parallel>], iteration_bounds = array<i64: 1>, scalar_prefetch = 0 : i64, scratch_operands = 0 : i64, tpu.core_type = #tpu.core_type<tc>, window_params = [{transform_indices = @transform_0, window_bounds = array<i64: 8, 32>}, {pipeline_mode = #tpu.pipeline_mode<synchronous>, transform_indices = @transform_1, window_bounds = array<i64: 32, 64>}, {pipeline_mode = #tpu.pipeline_mode<synchronous>, transform_indices = @transform_2, window_bounds = array<i64: 1, 64>}, {pipeline_mode = #tpu.pipeline_mode<synchronous>, transform_indices = @transform_3, window_bounds = array<i64: 64, 128>}, {pipeline_mode = #tpu.pipeline_mode<synchronous>, transform_indices = @transform_4, window_bounds = array<i64: 1, 128>}, {pipeline_mode = #tpu.pipeline_mode<synchronous>, transform_indices = @transform_5, window_bounds = array<i64: 32, 64>}, {pipeline_mode = #tpu.pipeline_mode<synchronous>, transform_indices = @transform_6, window_bounds = array<i64: 1, 64>}, {pipeline_mode = #tpu.pipeline_mode<synchronous>, transform_indices = @transform_7, window_bounds = array<i64: 64, 128>}, {pipeline_mode = #tpu.pipeline_mode<synchronous>, transform_indices = @transform_8, window_bounds = array<i64: 1, 128>}, {transform_indices = @transform_9, window_bounds = array<i64: 8, 128>}, {transform_indices = @transform_10, window_bounds = array<i64: 8, 128>}]} {
    %c0 = arith.constant 0 : index
    %c0_0 = arith.constant 0 : index
    %0 = vector.load %arg1[%c0, %c0_0] : memref<8x32xf32, #tpu.memory_space<vmem>>, vector<8x32xf32>
    %c0_1 = arith.constant 0 : index
    %c0_2 = arith.constant 0 : index
    %1 = vector.load %arg2[%c0_1, %c0_2] : memref<32x64xf32, #tpu.memory_space<vmem>>, vector<32x64xf32>
    %cst = arith.constant dense<0.000000e+00> : vector<8x64xf32>
    %2 = tpu.matmul %0, %1, %cst {dimension_numbers = #tpu.dot_dimension_numbers<[1], [0], [0], [1], [0, 0, 1, 1], [], []>} : vector<8x32xf32>, vector<32x64xf32>, vector<8x64xf32> -> vector<8x64xf32>
    %c0_3 = arith.constant 0 : index
    %c0_4 = arith.constant 0 : index
    %3 = vector.load %arg3[%c0_3, %c0_4] : memref<1x64xf32, #tpu.memory_space<vmem>>, vector<1x64xf32>
    %4 = vector.broadcast %3 : vector<1x64xf32> to vector<8x64xf32>
    %5 = arith.addf %2, %4 : vector<8x64xf32>
    %cst_5 = arith.constant 0.000000e+00 : f32
    %6 = vector.broadcast %cst_5 : f32 to vector<8x64xf32>
    %7 = arith.maximumf %5, %6 : vector<8x64xf32>
    %c0_6 = arith.constant 0 : index
    %c0_7 = arith.constant 0 : index
    %8 = vector.load %arg4[%c0_6, %c0_7] : memref<64x128xf32, #tpu.memory_space<vmem>>, vector<64x128xf32>
    %cst_8 = arith.constant dense<0.000000e+00> : vector<8x128xf32>
    %9 = tpu.matmul %7, %8, %cst_8 {dimension_numbers = #tpu.dot_dimension_numbers<[1], [0], [0], [1], [0, 0, 1, 1], [], []>} : vector<8x64xf32>, vector<64x128xf32>, vector<8x128xf32> -> vector<8x128xf32>
    %c0_9 = arith.constant 0 : index
    %c0_10 = arith.constant 0 : index
    %10 = vector.load %arg5[%c0_9, %c0_10] : memref<1x128xf32, #tpu.memory_space<vmem>>, vector<1x128xf32>
    %11 = vector.broadcast %10 : vector<1x128xf32> to vector<8x128xf32>
    %12 = arith.addf %9, %11 : vector<8x128xf32>
    %c0_11 = arith.constant 0 : index
    %c0_12 = arith.constant 0 : index
    %13 = vector.load %arg10[%c0_11, %c0_12] : memref<8x128xf32, #tpu.memory_space<vmem>>, vector<8x128xf32>
    tpu.vector_store %arg10[%c0_11, %c0_12], %12 {strides = array<i32>} : memref<8x128xf32, #tpu.memory_space<vmem>>, vector<8x128xf32>,
    %c0_13 = arith.constant 0 : index
    %c0_14 = arith.constant 0 : index
    %14 = vector.load %arg6[%c0_13, %c0_14] : memref<32x64xf32, #tpu.memory_space<vmem>>, vector<32x64xf32>
    %cst_15 = arith.constant dense<0.000000e+00> : vector<8x64xf32>
    %15 = tpu.matmul %0, %14, %cst_15 {dimension_numbers = #tpu.dot_dimension_numbers<[1], [0], [0], [1], [0, 0, 1, 1], [], []>} : vector<8x32xf32>, vector<32x64xf32>, vector<8x64xf32> -> vector<8x64xf32>
    %c0_16 = arith.constant 0 : index
    %c0_17 = arith.constant 0 : index
    %16 = vector.load %arg7[%c0_16, %c0_17] : memref<1x64xf32, #tpu.memory_space<vmem>>, vector<1x64xf32>
    %17 = vector.broadcast %16 : vector<1x64xf32> to vector<8x64xf32>
    %18 = arith.addf %15, %17 : vector<8x64xf32>
    %cst_18 = arith.constant 0.000000e+00 : f32
    %19 = vector.broadcast %cst_18 : f32 to vector<8x64xf32>
    %20 = arith.maximumf %18, %19 : vector<8x64xf32>
    %c0_19 = arith.constant 0 : index
    %c0_20 = arith.constant 0 : index
    %21 = vector.load %arg8[%c0_19, %c0_20] : memref<64x128xf32, #tpu.memory_space<vmem>>, vector<64x128xf32>
    %cst_21 = arith.constant dense<0.000000e+00> : vector<8x128xf32>
    %22 = tpu.matmul %20, %21, %cst_21 {dimension_numbers = #tpu.dot_dimension_numbers<[1], [0], [0], [1], [0, 0, 1, 1], [], []>} : vector<8x64xf32>, vector<64x128xf32>, vector<8x128xf32> -> vector<8x128xf32>
    %c0_22 = arith.constant 0 : index
    %c0_23 = arith.constant 0 : index
    %23 = vector.load %arg9[%c0_22, %c0_23] : memref<1x128xf32, #tpu.memory_space<vmem>>, vector<1x128xf32>
    %24 = vector.broadcast %23 : vector<1x128xf32> to vector<8x128xf32>
    %25 = arith.addf %22, %24 : vector<8x128xf32>
    %c0_24 = arith.constant 0 : index
    %c0_25 = arith.constant 0 : index
    %26 = vector.load %arg11[%c0_24, %c0_25] : memref<8x128xf32, #tpu.memory_space<vmem>>, vector<8x128xf32>
    tpu.vector_store %arg11[%c0_24, %c0_25], %25 {strides = array<i32>} : memref<8x128xf32, #tpu.memory_space<vmem>>, vector<8x128xf32>,
    return
  }
  func.func @transform_0(%arg0: i32) -> (i32, i32) {
    %c0_i32 = arith.constant 0 : i32
    %c0_i32_0 = arith.constant 0 : i32
    return %arg0, %c0_i32 : i32, i32
  }
  func.func @transform_1(%arg0: i32) -> (i32, i32) {
    %c0_i32 = arith.constant 0 : i32
    %c0_i32_0 = arith.constant 0 : i32
    %c0_i32_1 = arith.constant 0 : i32
    return %c0_i32, %c0_i32_0 : i32, i32
  }
  func.func @transform_2(%arg0: i32) -> (i32, i32) {
    %c0_i32 = arith.constant 0 : i32
    %c0_i32_0 = arith.constant 0 : i32
    %c0_i32_1 = arith.constant 0 : i32
    return %c0_i32, %c0_i32_0 : i32, i32
  }
  func.func @transform_3(%arg0: i32) -> (i32, i32) {
    %c0_i32 = arith.constant 0 : i32
    %c0_i32_0 = arith.constant 0 : i32
    %c0_i32_1 = arith.constant 0 : i32
    return %c0_i32, %c0_i32_0 : i32, i32
  }
  func.func @transform_4(%arg0: i32) -> (i32, i32) {
    %c0_i32 = arith.constant 0 : i32
    %c0_i32_0 = arith.constant 0 : i32
    %c0_i32_1 = arith.constant 0 : i32
    return %c0_i32, %c0_i32_0 : i32, i32
  }
  func.func @transform_5(%arg0: i32) -> (i32, i32) {
    %c0_i32 = arith.constant 0 : i32
    %c0_i32_0 = arith.constant 0 : i32
    %c0_i32_1 = arith.constant 0 : i32
    return %c0_i32, %c0_i32_0 : i32, i32
  }
  func.func @transform_6(%arg0: i32) -> (i32, i32) {
    %c0_i32 = arith.constant 0 : i32
    %c0_i32_0 = arith.constant 0 : i32
    %c0_i32_1 = arith.constant 0 : i32
    return %c0_i32, %c0_i32_0 : i32, i32
  }
  func.func @transform_7(%arg0: i32) -> (i32, i32) {
    %c0_i32 = arith.constant 0 : i32
    %c0_i32_0 = arith.constant 0 : i32
    %c0_i32_1 = arith.constant 0 : i32
    return %c0_i32, %c0_i32_0 : i32, i32
  }
  func.func @transform_8(%arg0: i32) -> (i32, i32) {
    %c0_i32 = arith.constant 0 : i32
    %c0_i32_0 = arith.constant 0 : i32
    %c0_i32_1 = arith.constant 0 : i32
    return %c0_i32, %c0_i32_0 : i32, i32
  }
  func.func @transform_9(%arg0: i32) -> (i32, i32) {
    %c0_i32 = arith.constant 0 : i32
    %c0_i32_0 = arith.constant 0 : i32
    return %arg0, %c0_i32 : i32, i32
  }
  func.func @transform_10(%arg0: i32) -> (i32, i32) {
    %c0_i32 = arith.constant 0 : i32
    %c0_i32_0 = arith.constant 0 : i32
    return %arg0, %c0_i32 : i32, i32
  }
}

</mosaic_0001>

<llo_original>
// kernel: tpu_custom_call.1
$region0: #{tpu_custom_call.1}
  #allocation0 [shape = 'u32[]', space=smem, size = 0x4, offset = 0x4, fixed_abs, tag = 'smem constant byte address 0x4 - core index']
  #allocation1 [shape = 'u32[72,128]{1,0:T(1,128)}', space=vmem, size = 0x9000, scoped, tag = 'internal scratch']
  %s0 = inlined_call_operand.hbm [shape: f32[8,32], index: 0, kind: input, shape index: {}]
  %s1 = inlined_call_operand.hbm [shape: f32[32,64], index: 1, kind: input, shape index: {}]
  %s2 = inlined_call_operand.vmem [shape: f32[1,64], index: 2, kind: input, shape index: {}]
  %s3 = inlined_call_operand.hbm [shape: f32[64,128], index: 3, kind: input, shape index: {}]
  %s4 = inlined_call_operand.vmem [shape: f32[1,128], index: 4, kind: input, shape index: {}]
  %s5 = inlined_call_operand.hbm [shape: f32[32,64], index: 5, kind: input, shape index: {}]
  %s6 = inlined_call_operand.vmem [shape: f32[1,64], index: 6, kind: input, shape index: {}]
  %s7 = inlined_call_operand.hbm [shape: f32[64,128], index: 7, kind: input, shape index: {}]
  %s8 = inlined_call_operand.vmem [shape: f32[1,128], index: 8, kind: input, shape index: {}]
  %s9 = inlined_call_operand.hbm [shape: f32[8,128], index: 9, kind: output, shape index: {0}]
  %s10 = inlined_call_operand.hbm [shape: f32[8,128], index: 10, kind: output, shape index: {1}]
  %11 = xla_tuple %s9, %s10
  %s12 = sld [smem:[#allocation0]]
  $region74: #{tpu_custom_call.1} parent=0
    _
  %s14 = ssub.s32 1, %s12
  %s15 = scalar_select 0, %s14, %s12
  $region1: #{tpu_custom_call.1} parent=0
    #allocation2 [shape = 'u8[4096]{0}', space=vmem, size = 0x1000, scoped, tag = 'input window, operand 0, single buffered']
    #allocation3 [shape = 's32[1]{0}', space=sflag, size = 0x4, scoped, tag = 'scoped memory for tpu_custom_call.1']
    #allocation4 [shape = 's32[1]{0}', space=sflag, size = 0x4, scoped, tag = 'scoped memory for tpu_custom_call.1']
    #allocation5 [shape = 'u8[16384]{0}', space=vmem, size = 0x4000, scoped, tag = 'input window, operand 1, single buffered']
    #allocation6 [shape = 's32[1]{0}', space=sflag, size = 0x4, scoped, tag = 'scoped memory for tpu_custom_call.1']
    #allocation7 [shape = 'u8[32768]{0}', space=vmem, size = 0x8000, scoped, tag = 'input window, operand 3, single buffered']
    #allocation8 [shape = 'u8[16384]{0}', space=vmem, size = 0x4000, scoped, tag = 'input window, operand 5, single buffered']
    #allocation9 [shape = 's32[1]{0}', space=sflag, size = 0x4, scoped, tag = 'scoped memory for tpu_custom_call.1']
    #allocation10 [shape = 'u8[32768]{0}', space=vmem, size = 0x8000, scoped, tag = 'input window, operand 7, single buffered']
    #allocation11 [shape = 'u8[4096]{0}', space=vmem, size = 0x1000, scoped, tag = 'output window, operand 0, single buffered']
    #allocation12 [shape = 'u8[4096]{0}', space=vmem, size = 0x1000, scoped, tag = 'output window, operand 1, single buffered']
    #allocation13 [shape = 's32[1]{0}', space=sflag, size = 0x4, scoped, tag = 'scoped memory for tpu_custom_call.1']
    %16 = vsyncpa [#allocation3], 0
    %17 = vsyncpa [#allocation6], 0
    %18 = vsyncpa [#allocation9], 0
    %19 = vsyncpa [#allocation4], 0
    %20 = vsyncpa [#allocation13], 0
    // Predicated region
    $region2: #{tpu_custom_call.1} parent=1 // pred_check
      _
    $region3: #{tpu_custom_call.1} parent=1 // pred_check_branch
      %22 = sbr.rel (0) target = $region5
    $region4: #{tpu_custom_call.1} parent=1 // pred_region
      %24 = vsyncadd [#allocation3], 0
      %s26 = sshll.u32 %s0, 4
      %s27 = int_to_ptr.hbm [resolvable:$true] %s26
      %s28 = sshll.u32 [#allocation2], 4
      %s29 = int_to_ptr.vmem [resolvable:$true] %s28
      %31 = dma.hbm_to_vmem [thread:$0]  %s27, 128, %s29, [#allocation3]
    $region5: #{tpu_custom_call.1} parent=1 // pred_fallthru
      _
    // Predicated region
    $region6: #{tpu_custom_call.1} parent=1 // pred_check
      _
    $region7: #{tpu_custom_call.1} parent=1 // pred_check_branch
      %33 = sbr.rel (0) target = $region9
    $region8: #{tpu_custom_call.1} parent=1 // pred_region
      %35 = vsyncadd [#allocation6], 0
      %s36 = sshll.u32 %s1, 4
      %s37 = int_to_ptr.hbm [resolvable:$true] %s36
      %s38 = sshll.u32 [#allocation5], 4
      %s39 = int_to_ptr.vmem [resolvable:$true] %s38
      %44 = dma.hbm_to_vmem [thread:$0]  %s37, 512, %s39, [#allocation6], 128, 128, 8
    $region9: #{tpu_custom_call.1} parent=1 // pred_fallthru
      _
    // Predicated region
    $region10: #{tpu_custom_call.1} parent=1 // pred_check
      _
    $region11: #{tpu_custom_call.1} parent=1 // pred_check_branch
      %46 = sbr.rel (0) target = $region13
    $region12: #{tpu_custom_call.1} parent=1 // pred_region
      _
    $region13: #{tpu_custom_call.1} parent=1 // pred_fallthru
      _
    // Predicated region
    $region14: #{tpu_custom_call.1} parent=1 // pred_check
      _
    $region15: #{tpu_custom_call.1} parent=1 // pred_check_branch
      %48 = sbr.rel (0) target = $region17
    $region16: #{tpu_custom_call.1} parent=1 // pred_region
      %50 = vsyncadd [#allocation6], 0
      %s51 = sshll.u32 %s3, 4
      %s52 = int_to_ptr.hbm [resolvable:$true] %s51
      %s53 = sshll.u32 [#allocation7], 4
      %s54 = int_to_ptr.vmem [resolvable:$true] %s53
      %59 = dma.hbm_to_vmem [thread:$0]  %s52, 1024, %s54, [#allocation6], 128, 128, 8
    $region17: #{tpu_custom_call.1} parent=1 // pred_fallthru
      _
    // Predicated region
    $region18: #{tpu_custom_call.1} parent=1 // pred_check
      _
    $region19: #{tpu_custom_call.1} parent=1 // pred_check_branch
      %61 = sbr.rel (0) target = $region21
    $region20: #{tpu_custom_call.1} parent=1 // pred_region
      _
    $region21: #{tpu_custom_call.1} parent=1 // pred_fallthru
      _
    // Predicated region
    $region22: #{tpu_custom_call.1} parent=1 // pred_check
      _
    $region23: #{tpu_custom_call.1} parent=1 // pred_check_branch
      %63 = sbr.rel (0) target = $region25
    $region24: #{tpu_custom_call.1} parent=1 // pred_region
      %65 = vsyncadd [#allocation9], 0
      %s66 = sshll.u32 %s5, 4
      %s67 = int_to_ptr.hbm [resolvable:$true] %s66
      %s68 = sshll.u32 [#allocation8], 4
      %s69 = int_to_ptr.vmem [resolvable:$true] %s68
      %74 = dma.hbm_to_vmem [thread:$0]  %s67, 512, %s69, [#allocation9], 128, 128, 8
    $region25: #{tpu_custom_call.1} parent=1 // pred_fallthru
      _
    // Predicated region
    $region26: #{tpu_custom_call.1} parent=1 // pred_check
      _
    $region27: #{tpu_custom_call.1} parent=1 // pred_check_branch
      %76 = sbr.rel (0) target = $region29
    $region28: #{tpu_custom_call.1} parent=1 // pred_region
      _
    $region29: #{tpu_custom_call.1} parent=1 // pred_fallthru
      _
    // Predicated region
    $region30: #{tpu_custom_call.1} parent=1 // pred_check
      _
    $region31: #{tpu_custom_call.1} parent=1 // pred_check_branch
      %78 = sbr.rel (0) target = $region33
    $region32: #{tpu_custom_call.1} parent=1 // pred_region
      %80 = vsyncadd [#allocation9], 0
      %s81 = sshll.u32 %s7, 4
      %s82 = int_to_ptr.hbm [resolvable:$true] %s81
      %s83 = sshll.u32 [#allocation10], 4
      %s84 = int_to_ptr.vmem [resolvable:$true] %s83
      %89 = dma.hbm_to_vmem [thread:$0]  %s82, 1024, %s84, [#allocation9], 128, 128, 8
    $region33: #{tpu_custom_call.1} parent=1 // pred_fallthru
      _
    // Predicated region
    $region34: #{tpu_custom_call.1} parent=1 // pred_check
      _
    $region35: #{tpu_custom_call.1} parent=1 // pred_check_branch
      %91 = sbr.rel (0) target = $region37
    $region36: #{tpu_custom_call.1} parent=1 // pred_region
      _
    $region37: #{tpu_custom_call.1} parent=1 // pred_fallthru
      _
    // Predicated region
    $region38: #{tpu_custom_call.1} parent=1 // pred_check
      _
    $region39: #{tpu_custom_call.1} parent=1 // pred_check_branch
      %93 = sbr.rel (0) target = $region41
    $region40: #{tpu_custom_call.1} parent=1 // pred_region
      %95 = dma.done [#allocation3], 128
    $region41: #{tpu_custom_call.1} parent=1 // pred_fallthru
      _
    // Predicated region
    $region42: #{tpu_custom_call.1} parent=1 // pred_check
      _
    $region43: #{tpu_custom_call.1} parent=1 // pred_check_branch
      %97 = sbr.rel (0) target = $region45
    $region44: #{tpu_custom_call.1} parent=1 // pred_region
      %99 = dma.done [#allocation6], 512
    $region45: #{tpu_custom_call.1} parent=1 // pred_fallthru
      _
    // Predicated region
    $region46: #{tpu_custom_call.1} parent=1 // pred_check
      _
    $region47: #{tpu_custom_call.1} parent=1 // pred_check_branch
      %101 = sbr.rel (0) target = $region49
    $region48: #{tpu_custom_call.1} parent=1 // pred_region
      %103 = dma.done [#allocation6], 1024
    $region49: #{tpu_custom_call.1} parent=1 // pred_fallthru
      _
    // Predicated region
    $region50: #{tpu_custom_call.1} parent=1 // pred_check
      _
    $region51: #{tpu_custom_call.1} parent=1 // pred_check_branch
      %105 = sbr.rel (0) target = $region53
    $region52: #{tpu_custom_call.1} parent=1 // pred_region
      %107 = dma.done [#allocation9], 512
    $region53: #{tpu_custom_call.1} parent=1 // pred_fallthru
      _
    // Predicated region
    $region54: #{tpu_custom_call.1} parent=1 // pred_check
      _
    $region55: #{tpu_custom_call.1} parent=1 // pred_check_branch
      %109 = sbr.rel (0) target = $region57
    $region56: #{tpu_custom_call.1} parent=1 // pred_region
      %111 = dma.done [#allocation9], 1024
    $region57: #{tpu_custom_call.1} parent=1 // pred_fallthru
      _
    %v112 = vld [vmem:[#allocation2] sm:$0xff]
    %v113 = vld [vmem:[#allocation5] sm:$0xff]
    %v114 = vld [vmem:[#allocation5 + $0x8] sm:$0xff]
    %v115 = vld [vmem:[#allocation5 + $0x10] sm:$0xff]
    %v116 = vld [vmem:[#allocation5 + $0x18] sm:$0xff]
    %v117 = vld [vmem:[%s2] sm:$0x1]
    %v119 = vperm.slane %v117, 0
    %vm121 = vcmask 261120
    %v123 = vsel %vm121, %v112, 0
    %125 = vmatpush.msra.mxu0 0.0
    %126 = vmatpush.msra.mxu0 0.0
    %127 = vmatpush.msra.mxu0 0.0
    %128 = vmatpush.msra.mxu0 0.0
    %129 = vmatpush.msra.mxu0 0.0
    %130 = vmatpush.msra.mxu0 0.0
    %131 = vmatpush.msra.mxu0 0.0
    %132 = vmatpush.msra.mxu0 0.0
    %133 = vmatpush.msra.mxu0 0.0
    %134 = vmatpush.msra.mxu0 0.0
    %135 = vmatpush.msra.mxu0 0.0
    %136 = vmatpush.msra.mxu0 0.0
    %137 = vmatpush.msra.mxu0 %v116
    %138 = vmatpush.msra.mxu0 %v115
    %139 = vmatpush.msra.mxu0 %v114
    %140 = vmatpush.msra.mxu0 %v113
    %141 = vmatmul.f32.gmra.mxu0 %v123
    %v142 = vpop.f32.mrf.mxu0
    %v143 = vadd.f32 %v119, %v142
    %144 = vdwg.mxu0
    %v145 = vmax.f32 %v143, 0.0
    %v146 = vld [vmem:[#allocation7] sm:$0xff]
    %v147 = vld [vmem:[#allocation7 + $0x8] sm:$0xff]
    %v148 = vld [vmem:[#allocation7 + $0x10] sm:$0xff]
    %v149 = vld [vmem:[#allocation7 + $0x18] sm:$0xff]
    %v150 = vld [vmem:[#allocation7 + $0x20] sm:$0xff]
    %v151 = vld [vmem:[#allocation7 + $0x28] sm:$0xff]
    %v152 = vld [vmem:[#allocation7 + $0x30] sm:$0xff]
    %v153 = vld [vmem:[#allocation7 + $0x38] sm:$0xff]
    %v154 = vld [vmem:[%s4] sm:$0x1]
    %v156 = vperm.slane %v154, 0
    %vm158 = vcmask 523264
    %v160 = vsel %vm158, %v145, 0
    %162 = vmatpush.msra.mxu0 0.0
    %163 = vmatpush.msra.mxu0 0.0
    %164 = vmatpush.msra.mxu0 0.0
    %165 = vmatpush.msra.mxu0 0.0
    %166 = vmatpush.msra.mxu0 0.0
    %167 = vmatpush.msra.mxu0 0.0
    %168 = vmatpush.msra.mxu0 0.0
    %169 = vmatpush.msra.mxu0 0.0
    %170 = vmatpush.msra.mxu0 %v153
    %171 = vmatpush.msra.mxu0 %v152
    %172 = vmatpush.msra.mxu0 %v151
    %173 = vmatpush.msra.mxu0 %v150
    %174 = vmatpush.msra.mxu0 %v149
    %175 = vmatpush.msra.mxu0 %v148
    %176 = vmatpush.msra.mxu0 %v147
    %177 = vmatpush.msra.mxu0 %v146
    %178 = vmatmul.f32.gmra.mxu0 %v160
    %v179 = vpop.f32.mrf.mxu0
    %v180 = vadd.f32 %v156, %v179
    %181 = vdwg.mxu0
    %182 = vst [vmem:[#allocation11] sm:$0xff] %v180
    %v183 = vld [vmem:[#allocation8] sm:$0xff]
    %v184 = vld [vmem:[#allocation8 + $0x8] sm:$0xff]
    %v185 = vld [vmem:[#allocation8 + $0x10] sm:$0xff]
    %v186 = vld [vmem:[#allocation8 + $0x18] sm:$0xff]
    %v187 = vld [vmem:[%s6] sm:$0x1]
    %v189 = vperm.slane %v187, 0
    %191 = vmatpush.msra.mxu0 0.0
    %192 = vmatpush.msra.mxu0 0.0
    %193 = vmatpush.msra.mxu0 0.0
    %194 = vmatpush.msra.mxu0 0.0
    %195 = vmatpush.msra.mxu0 0.0
    %196 = vmatpush.msra.mxu0 0.0
    %197 = vmatpush.msra.mxu0 0.0
    %198 = vmatpush.msra.mxu0 0.0
    %199 = vmatpush.msra.mxu0 0.0
    %200 = vmatpush.msra.mxu0 0.0
    %201 = vmatpush.msra.mxu0 0.0
    %202 = vmatpush.msra.mxu0 0.0
    %203 = vmatpush.msra.mxu0 %v186
    %204 = vmatpush.msra.mxu0 %v185
    %205 = vmatpush.msra.mxu0 %v184
    %206 = vmatpush.msra.mxu0 %v183
    %207 = vmatmul.f32.gmra.mxu0 %v123
    %v208 = vpop.f32.mrf.mxu0
    %v209 = vadd.f32 %v189, %v208
    %210 = vdwg.mxu0
    %v211 = vmax.f32 %v209, 0.0
    %v212 = vld [vmem:[#allocation10] sm:$0xff]
    %v213 = vld [vmem:[#allocation10 + $0x8] sm:$0xff]
    %v214 = vld [vmem:[#allocation10 + $0x10] sm:$0xff]
    %v215 = vld [vmem:[#allocation10 + $0x18] sm:$0xff]
    %v216 = vld [vmem:[#allocation10 + $0x20] sm:$0xff]
    %v217 = vld [vmem:[#allocation10 + $0x28] sm:$0xff]
    %v218 = vld [vmem:[#allocation10 + $0x30] sm:$0xff]
    %v219 = vld [vmem:[#allocation10 + $0x38] sm:$0xff]
    %v220 = vld [vmem:[%s8] sm:$0x1]
    %v222 = vperm.slane %v220, 0
    %v225 = vsel %vm158, %v211, 0
    %227 = vmatpush.msra.mxu0 0.0
    %228 = vmatpush.msra.mxu0 0.0
    %229 = vmatpush.msra.mxu0 0.0
    %230 = vmatpush.msra.mxu0 0.0
    %231 = vmatpush.msra.mxu0 0.0
    %232 = vmatpush.msra.mxu0 0.0
    %233 = vmatpush.msra.mxu0 0.0
    %234 = vmatpush.msra.mxu0 0.0
    %235 = vmatpush.msra.mxu0 %v219
    %236 = vmatpush.msra.mxu0 %v218
    %237 = vmatpush.msra.mxu0 %v217
    %238 = vmatpush.msra.mxu0 %v216
    %239 = vmatpush.msra.mxu0 %v215
    %240 = vmatpush.msra.mxu0 %v214
    %241 = vmatpush.msra.mxu0 %v213
    %242 = vmatpush.msra.mxu0 %v212
    %243 = vmatmul.f32.gmra.mxu0 %v225
    %v244 = vpop.f32.mrf.mxu0
    %v245 = vadd.f32 %v222, %v244
    %246 = vdwg.mxu0
    %247 = vst [vmem:[#allocation12] sm:$0xff] %v245
    // Predicated region
    $region58: #{tpu_custom_call.1} parent=1 // pred_check
      _
    $region59: #{tpu_custom_call.1} parent=1 // pred_check_branch
      %249 = sbr.rel (0) target = $region61
    $region60: #{tpu_custom_call.1} parent=1 // pred_region
      %251 = vsyncadd [#allocation4], 0
      %s253 = sshll.u32 [#allocation11], 4
      %s254 = int_to_ptr.vmem [resolvable:$true] %s253
      %s255 = sshll.u32 %s9, 4
      %s256 = int_to_ptr.hbm [resolvable:$true] %s255
      %258 = dma.vmem_to_hbm [thread:$0]  %s254, 128, %s256, [#allocation4]
    $region61: #{tpu_custom_call.1} parent=1 // pred_fallthru
      _
    // Predicated region
    $region62: #{tpu_custom_call.1} parent=1 // pred_check
      _
    $region63: #{tpu_custom_call.1} parent=1 // pred_check_branch
      %260 = sbr.rel (0) target = $region65
    $region64: #{tpu_custom_call.1} parent=1 // pred_region
      %262 = vsyncadd [#allocation13], 0
      %s264 = sshll.u32 [#allocation12], 4
      %s265 = int_to_ptr.vmem [resolvable:$true] %s264
      %s266 = sshll.u32 %s10, 4
      %s267 = int_to_ptr.hbm [resolvable:$true] %s266
      %269 = dma.vmem_to_hbm [thread:$0]  %s265, 128, %s267, [#allocation13]
    $region65: #{tpu_custom_call.1} parent=1 // pred_fallthru
      _
    // Predicated region
    $region66: #{tpu_custom_call.1} parent=1 // pred_check
      _
    $region67: #{tpu_custom_call.1} parent=1 // pred_check_branch
      %271 = sbr.rel (0) target = $region69
    $region68: #{tpu_custom_call.1} parent=1 // pred_region
      %273 = dma.done [#allocation4], 128
    $region69: #{tpu_custom_call.1} parent=1 // pred_fallthru
      _
    // Predicated region
    $region70: #{tpu_custom_call.1} parent=1 // pred_check
      _
    $region71: #{tpu_custom_call.1} parent=1 // pred_check_branch
      %275 = sbr.rel (0) target = $region73
    $region72: #{tpu_custom_call.1} parent=1 // pred_region
      %277 = dma.done [#allocation13], 128
    $region73: #{tpu_custom_call.1} parent=1 // pred_fallthru
      _
    %278 = vsyncpa [#allocation3], 1
    %279 = vsyncpa [#allocation6], 1
    %280 = vsyncpa [#allocation9], 1
    %281 = vsyncpa [#allocation4], 1
    %282 = vsyncpa [#allocation13], 1

</llo_original>
